<compile_context>
chip_gen: v5e
topology: v5e:2x2
jax: 0.10.0
libtpu: 0.0.40
codegen_flags: <defaults>
</compile_context>

<pallas_src>
import functools
from math import log

import jax
import jax.numpy as jnp
from jax.experimental import pallas as pl
from jax.experimental.pallas import tpu as pltpu

_LANE = 128
_ROW_ALIGN = 16  # bf16 MXU operand sublane alignment


# ------------------------------ Fused kernel ------------------------------- #

def _fused_forward_kernel(x_ref, adj_ref, w0_ref, b0_ref, ws_ref, w1_ref, b1_ref,
                          o_ref, *, alpha, one_minus_betas, n_valid):
    """Linear0 + L GCN2 layers + Linear1, everything resident in VMEM.

    adj_ref: bf16, already scaled by (1 - alpha).
    ws_ref:  bf16, stacked (L, H, H), already scaled by beta_l.
    """
    bf16 = jnp.bfloat16

    # ---- Linear0 + relu ---------------------------------------------------
    x = jnp.dot(x_ref[...].astype(bf16), w0_ref[...],
                preferred_element_type=jnp.float32) + b0_ref[...]
    x = jnp.maximum(x, 0.0)

    # Explicitly zero padded node rows (they are relu(b0) otherwise) so they can
    # never leak into real rows via the x0 / residual paths.
    if x.shape[0] > n_valid:
        row_ids = jax.lax.broadcasted_iota(jnp.int32, x.shape, 0)
        x = jnp.where(row_ids < n_valid, x, 0.0)

    x0 = x
    ax0 = alpha * x0  # hoisted: constant across all layers

    # ---- GCN2 layers (unrolled; per-layer constants baked at trace time) ---
    for l, one_minus_beta in enumerate(one_minus_betas):
        # prop = (1 - alpha) * (adj @ x): the (1 - alpha) is folded into adj_ref.
        prop = jnp.dot(adj_ref[...], x.astype(bf16),
                       preferred_element_type=jnp.float32)
        s = prop + ax0
        # beta is folded into ws_ref[l]: s @ (beta_l * W_l)
        sw = jnp.dot(s.astype(bf16), ws_ref[l],
                     preferred_element_type=jnp.float32)
        h = one_minus_beta * s + sw
        x = jnp.maximum(h + x, 0.0)

    # ---- Linear1 (lane-dense padded output store) --------------------------
    out = jnp.dot(x.astype(bf16), w1_ref[...],
                  preferred_element_type=jnp.float32) + b1_ref[...]
    o_ref[...] = out.astype(o_ref.dtype)


_VMEM_SPEC = pl.BlockSpec(memory_space=pltpu.MemorySpace.VMEM)


def _pad_to(a, shape):
    return jnp.pad(a, [(0, t - s) for s, t in zip(a.shape, shape)])


def _round_up(n, m):
    return ((n + m - 1) // m) * m


def _vmem_budget_bytes(n_p, f_p, hidden, c_p, num_layers):
    resident = (
        n_p * f_p * 4                        # x input (f32)
        + n_p * n_p * 2                      # adj (bf16)
        + f_p * hidden * 2                   # w0 (bf16)
        + hidden * 4                         # b0 (f32)
        + num_layers * hidden * hidden * 2   # stacked conv weights (bf16)
        + hidden * c_p * 2                   # w1 (bf16)
        + c_p * 4                            # b1 (f32)
        + n_p * c_p * 4                      # output (f32)
    )
    work = 8 * n_p * hidden * 4              # x, x0, ax0, prop, s, sw, h, slack (f32)
    return resident + work


# ------------------------------ Model wrapper ------------------------------ #

def neural_graph_composer_forward(x, adj, params, *, alpha, theta):
    # dropout(p=0.0) is the identity -> omitted.
    n, f = x.shape
    hidden = params["w0"].shape[1]
    n_classes = params["w1"].shape[1]
    num_layers = len(params["conv_ws"])
    assert hidden % _LANE == 0, "hidden channels assumed lane-aligned"

    # Rows only need sublane alignment; last (lane) dims padded to 128.
    n_p = _round_up(max(n, _ROW_ALIGN), _ROW_ALIGN)
    f_p = _round_up(max(f, _LANE), _LANE)
    c_p = _round_up(max(n_classes, _LANE), _LANE)

    bf16 = jnp.bfloat16

    # adj: pad (zero columns keep padded node rows isolated from real rows), fold the
    # (1 - alpha) propagation scale in once, cast to bf16 once -> single bf16 DMA.
    adj_p = ((1.0 - alpha) * _pad_to(adj, (n_p, n_p))).astype(bf16)

    x_p = _pad_to(x, (n_p, f_p))
    w0_p = _pad_to(params["w0"], (f_p, hidden)).astype(bf16)
    w1_p = _pad_to(params["w1"], (hidden, c_p)).astype(bf16)
    b1_p = _pad_to(params["b1"], (1, c_p))

    betas = tuple(log(theta / (l + 1) + 1.0) for l in range(num_layers))
    one_minus_betas = tuple(1.0 - b for b in betas)
    # Fold beta_l into the conv weights host-side; stack to (L, H, H) bf16.
    ws = jnp.stack(
        [(b * w).astype(bf16) for b, w in zip(betas, params["conv_ws"])], axis=0)

    vmem_limit = max(int(1.3 * _vmem_budget_bytes(n_p, f_p, hidden, c_p, num_layers)),
                     4 << 20)

    out_p = pl.pallas_call(
        functools.partial(_fused_forward_kernel, alpha=alpha,
                          one_minus_betas=one_minus_betas, n_valid=n),
        out_shape=jax.ShapeDtypeStruct((n_p, c_p), jnp.float32),
        in_specs=[_VMEM_SPEC] * 7,
        out_specs=_VMEM_SPEC,
        compiler_params=pltpu.CompilerParams(vmem_limit_bytes=vmem_limit),
    )(x_p, adj_p, w0_p, params["b0"], ws, w1_p, b1_p)

    return out_p[:n, :n_classes]


def reference_forward(x, adj, params, *, alpha, theta):
    x = jnp.maximum(x @ params["w0"] + params["b0"], 0.0)
    x0 = x
    for layer_idx, w in enumerate(params["conv_ws"]):
        beta = log(theta / (layer_idx + 1) + 1.0)
        s = (1.0 - alpha) * (adj @ x) + alpha * x0
        out = (1.0 - beta) * s + beta * (s @ w)
        x = jnp.maximum(out + x, 0.0)
    return x @ params["w1"] + params["b1"]


def init_params(key, num_features, hidden, num_classes, num_layers):
    keys = jax.random.split(key, 4 + num_layers)
    scale0 = 1.0 / jnp.sqrt(num_features)
    scale1 = 1.0 / jnp.sqrt(hidden)
    return {
        "w0": jax.random.normal(keys[0], (num_features, hidden), jnp.float32) * scale0,
        "b0": jax.random.normal(keys[1], (1, hidden), jnp.float32) * 0.01,
        "w1": jax.random.normal(keys[2], (hidden, num_classes), jnp.float32) * scale1,
        "b1": jax.random.normal(keys[3], (1, num_classes), jnp.float32) * 0.01,
        "conv_ws": [
            jax.random.normal(keys[4 + l], (hidden, hidden), jnp.float32) * scale1
            for l in range(num_layers)
        ],
    }


# ---------------------------------- Main ----------------------------------- #

if __name__ == "__main__":
    # Small, deterministic problem: 64 graph nodes, 32 input features,
    # 128 hidden channels, 16 classes, 4 GCN2 layers.
    N, NUM_FEATURES, HIDDEN, NUM_CLASSES, NUM_LAYERS = 64, 32, 128, 16, 4
    ALPHA, THETA = 0.5, 1.0

    root = jax.random.PRNGKey(0)
    k_x, k_adj, k_params = jax.random.split(root, 3)

    x = jax.random.normal(k_x, (N, NUM_FEATURES), jnp.float32)

    # Deterministic dense "adj_t": random sparse-ish symmetric matrix, row-normalized
    # (normalize=False in GCN2Conv, so any fixed adjacency is valid input).
    mask = (jax.random.uniform(k_adj, (N, N)) < 0.1).astype(jnp.float32)
    adj = mask + mask.T + jnp.eye(N, dtype=jnp.float32)
    adj = adj / jnp.maximum(adj.sum(axis=1, keepdims=True), 1.0)

    params = init_params(k_params, NUM_FEATURES, HIDDEN, NUM_CLASSES, NUM_LAYERS)

    out = neural_graph_composer_forward(x, adj, params, alpha=ALPHA, theta=THETA)
    out = jax.block_until_ready(out)

    ref = jax.block_until_ready(
        reference_forward(x, adj, params, alpha=ALPHA, theta=THETA)
    )

    assert out.shape == (N, NUM_CLASSES), out.shape
    # bf16 MXU operands (f32 accumulation) -> relaxed tolerance vs. the f32 reference.
    max_err = float(jnp.max(jnp.abs(out - ref)))
    ref_scale = float(jnp.max(jnp.abs(ref)))
    assert max_err <= 5e-2 * max(1.0, ref_scale), (max_err, ref_scale)

    print("KERNEL_OK")
</pallas_src>

<mosaic_0001>
module attributes {stable_mosaic.version = 11 : i64} {
  func.func @_fused_forward_kernel(%arg0: memref<64x128xf32, #tpu.memory_space<vmem>>, %arg1: memref<64x64xbf16, #tpu.memory_space<vmem>>, %arg2: memref<128x128xbf16, #tpu.memory_space<vmem>>, %arg3: memref<1x128xf32, #tpu.memory_space<vmem>>, %arg4: memref<4x128x128xbf16, #tpu.memory_space<vmem>>, %arg5: memref<128x128xbf16, #tpu.memory_space<vmem>>, %arg6: memref<1x128xf32, #tpu.memory_space<vmem>>, %arg7: memref<64x128xf32, #tpu.memory_space<vmem>>) attributes {dimension_semantics = [], scalar_prefetch = 0 : i64, scratch_operands = 0 : i64, tpu.core_type = #tpu.core_type<tc>} {
    %c0 = arith.constant 0 : index
    %c0_0 = arith.constant 0 : index
    %0 = vector.load %arg0[%c0, %c0_0] : memref<64x128xf32, #tpu.memory_space<vmem>>, vector<64x128xf32>
    %1 = arith.truncf %0 : vector<64x128xf32> to vector<64x128xbf16>
    %c0_1 = arith.constant 0 : index
    %c0_2 = arith.constant 0 : index
    %2 = vector.load %arg2[%c0_1, %c0_2] : memref<128x128xbf16, #tpu.memory_space<vmem>>, vector<128x128xbf16>
    %cst = arith.constant dense<0.000000e+00> : vector<64x128xf32>
    %3 = tpu.matmul %1, %2, %cst {dimension_numbers = #tpu.dot_dimension_numbers<[1], [0], [0], [1], [0, 0, 1, 1], [], []>} : vector<64x128xbf16>, vector<128x128xbf16>, vector<64x128xf32> -> vector<64x128xf32>
    %c0_3 = arith.constant 0 : index
    %c0_4 = arith.constant 0 : index
    %4 = vector.load %arg3[%c0_3, %c0_4] : memref<1x128xf32, #tpu.memory_space<vmem>>, vector<1x128xf32>
    %5 = vector.broadcast %4 : vector<1x128xf32> to vector<64x128xf32>
    %6 = arith.addf %3, %5 : vector<64x128xf32>
    %cst_5 = arith.constant 0.000000e+00 : f32
    %7 = vector.broadcast %cst_5 : f32 to vector<64x128xf32>
    %8 = arith.maximumf %6, %7 : vector<64x128xf32>
    %cst_6 = arith.constant 5.000000e-01 : f32
    %9 = vector.broadcast %cst_6 : f32 to vector<64x128xf32>
    %10 = arith.mulf %9, %8 : vector<64x128xf32>
    %c0_7 = arith.constant 0 : index
    %c0_8 = arith.constant 0 : index
    %11 = vector.load %arg1[%c0_7, %c0_8] : memref<64x64xbf16, #tpu.memory_space<vmem>>, vector<64x64xbf16>
    %12 = arith.truncf %8 : vector<64x128xf32> to vector<64x128xbf16>
    %cst_9 = arith.constant dense<0.000000e+00> : vector<64x128xf32>
    %13 = tpu.matmul %11, %12, %cst_9 {dimension_numbers = #tpu.dot_dimension_numbers<[1], [0], [0], [1], [0, 0, 1, 1], [], []>} : vector<64x64xbf16>, vector<64x128xbf16>, vector<64x128xf32> -> vector<64x128xf32>
    %14 = arith.addf %13, %10 : vector<64x128xf32>
    %15 = arith.truncf %14 : vector<64x128xf32> to vector<64x128xbf16>
    %c0_10 = arith.constant 0 : index
    %c0_11 = arith.constant 0 : index
    %c0_12 = arith.constant 0 : index
    %16 = vector.load %arg4[%c0_10, %c0_11, %c0_12] : memref<4x128x128xbf16, #tpu.memory_space<vmem>>, vector<1x128x128xbf16>
    %17 = vector.shape_cast %16 : vector<1x128x128xbf16> to vector<128x128xbf16>
    %cst_13 = arith.constant dense<0.000000e+00> : vector<64x128xf32>
    %18 = tpu.matmul %15, %17, %cst_13 {dimension_numbers = #tpu.dot_dimension_numbers<[1], [0], [0], [1], [0, 0, 1, 1], [], []>} : vector<64x128xbf16>, vector<128x128xbf16>, vector<64x128xf32> -> vector<64x128xf32>
    %cst_14 = arith.constant 0.306852818 : f32
    %19 = vector.broadcast %cst_14 : f32 to vector<64x128xf32>
    %20 = arith.mulf %19, %14 : vector<64x128xf32>
    %21 = arith.addf %20, %18 : vector<64x128xf32>
    %22 = arith.addf %21, %8 : vector<64x128xf32>
    %cst_15 = arith.constant 0.000000e+00 : f32
    %23 = vector.broadcast %cst_15 : f32 to vector<64x128xf32>
    %24 = arith.maximumf %22, %23 : vector<64x128xf32>
    %c0_16 = arith.constant 0 : index
    %c0_17 = arith.constant 0 : index
    %25 = vector.load %arg1[%c0_16, %c0_17] : memref<64x64xbf16, #tpu.memory_space<vmem>>, vector<64x64xbf16>
    %26 = arith.truncf %24 : vector<64x128xf32> to vector<64x128xbf16>
    %cst_18 = arith.constant dense<0.000000e+00> : vector<64x128xf32>
    %27 = tpu.matmul %25, %26, %cst_18 {dimension_numbers = #tpu.dot_dimension_numbers<[1], [0], [0], [1], [0, 0, 1, 1], [], []>} : vector<64x64xbf16>, vector<64x128xbf16>, vector<64x128xf32> -> vector<64x128xf32>
    %28 = arith.addf %27, %10 : vector<64x128xf32>
    %29 = arith.truncf %28 : vector<64x128xf32> to vector<64x128xbf16>
    %c1 = arith.constant 1 : index
    %c0_19 = arith.constant 0 : index
    %c0_20 = arith.constant 0 : index
    %30 = vector.load %arg4[%c1, %c0_19, %c0_20] : memref<4x128x128xbf16, #tpu.memory_space<vmem>>, vector<1x128x128xbf16>
    %31 = vector.shape_cast %30 : vector<1x128x128xbf16> to vector<128x128xbf16>
    %cst_21 = arith.constant dense<0.000000e+00> : vector<64x128xf32>
    %32 = tpu.matmul %29, %31, %cst_21 {dimension_numbers = #tpu.dot_dimension_numbers<[1], [0], [0], [1], [0, 0, 1, 1], [], []>} : vector<64x128xbf16>, vector<128x128xbf16>, vector<64x128xf32> -> vector<64x128xf32>
    %cst_22 = arith.constant 0.594534874 : f32
    %33 = vector.broadcast %cst_22 : f32 to vector<64x128xf32>
    %34 = arith.mulf %33, %28 : vector<64x128xf32>
    %35 = arith.addf %34, %32 : vector<64x128xf32>
    %36 = arith.addf %35, %24 : vector<64x128xf32>
    %cst_23 = arith.constant 0.000000e+00 : f32
    %37 = vector.broadcast %cst_23 : f32 to vector<64x128xf32>
    %38 = arith.maximumf %36, %37 : vector<64x128xf32>
    %c0_24 = arith.constant 0 : index
    %c0_25 = arith.constant 0 : index
    %39 = vector.load %arg1[%c0_24, %c0_25] : memref<64x64xbf16, #tpu.memory_space<vmem>>, vector<64x64xbf16>
    %40 = arith.truncf %38 : vector<64x128xf32> to vector<64x128xbf16>
    %cst_26 = arith.constant dense<0.000000e+00> : vector<64x128xf32>
    %41 = tpu.matmul %39, %40, %cst_26 {dimension_numbers = #tpu.dot_dimension_numbers<[1], [0], [0], [1], [0, 0, 1, 1], [], []>} : vector<64x64xbf16>, vector<64x128xbf16>, vector<64x128xf32> -> vector<64x128xf32>
    %42 = arith.addf %41, %10 : vector<64x128xf32>
    %43 = arith.truncf %42 : vector<64x128xf32> to vector<64x128xbf16>
    %c2 = arith.constant 2 : index
    %c0_27 = arith.constant 0 : index
    %c0_28 = arith.constant 0 : index
    %44 = vector.load %arg4[%c2, %c0_27, %c0_28] : memref<4x128x128xbf16, #tpu.memory_space<vmem>>, vector<1x128x128xbf16>
    %45 = vector.shape_cast %44 : vector<1x128x128xbf16> to vector<128x128xbf16>
    %cst_29 = arith.constant dense<0.000000e+00> : vector<64x128xf32>
    %46 = tpu.matmul %43, %45, %cst_29 {dimension_numbers = #tpu.dot_dimension_numbers<[1], [0], [0], [1], [0, 0, 1, 1], [], []>} : vector<64x128xbf16>, vector<128x128xbf16>, vector<64x128xf32> -> vector<64x128xf32>
    %cst_30 = arith.constant 0.712317943 : f32
    %47 = vector.broadcast %cst_30 : f32 to vector<64x128xf32>
    %48 = arith.mulf %47, %42 : vector<64x128xf32>
    %49 = arith.addf %48, %46 : vector<64x128xf32>
    %50 = arith.addf %49, %38 : vector<64x128xf32>
    %cst_31 = arith.constant 0.000000e+00 : f32
    %51 = vector.broadcast %cst_31 : f32 to vector<64x128xf32>
    %52 = arith.maximumf %50, %51 : vector<64x128xf32>
    %c0_32 = arith.constant 0 : index
    %c0_33 = arith.constant 0 : index
    %53 = vector.load %arg1[%c0_32, %c0_33] : memref<64x64xbf16, #tpu.memory_space<vmem>>, vector<64x64xbf16>
    %54 = arith.truncf %52 : vector<64x128xf32> to vector<64x128xbf16>
    %cst_34 = arith.constant dense<0.000000e+00> : vector<64x128xf32>
    %55 = tpu.matmul %53, %54, %cst_34 {dimension_numbers = #tpu.dot_dimension_numbers<[1], [0], [0], [1], [0, 0, 1, 1], [], []>} : vector<64x64xbf16>, vector<64x128xbf16>, vector<64x128xf32> -> vector<64x128xf32>
    %56 = arith.addf %55, %10 : vector<64x128xf32>
    %57 = arith.truncf %56 : vector<64x128xf32> to vector<64x128xbf16>
    %c3 = arith.constant 3 : index
    %c0_35 = arith.constant 0 : index
    %c0_36 = arith.constant 0 : index
    %58 = vector.load %arg4[%c3, %c0_35, %c0_36] : memref<4x128x128xbf16, #tpu.memory_space<vmem>>, vector<1x128x128xbf16>
    %59 = vector.shape_cast %58 : vector<1x128x128xbf16> to vector<128x128xbf16>
    %cst_37 = arith.constant dense<0.000000e+00> : vector<64x128xf32>
    %60 = tpu.matmul %57, %59, %cst_37 {dimension_numbers = #tpu.dot_dimension_numbers<[1], [0], [0], [1], [0, 0, 1, 1], [], []>} : vector<64x128xbf16>, vector<128x128xbf16>, vector<64x128xf32> -> vector<64x128xf32>
    %cst_38 = arith.constant 0.776856422 : f32
    %61 = vector.broadcast %cst_38 : f32 to vector<64x128xf32>
    %62 = arith.mulf %61, %56 : vector<64x128xf32>
    %63 = arith.addf %62, %60 : vector<64x128xf32>
    %64 = arith.addf %63, %52 : vector<64x128xf32>
    %cst_39 = arith.constant 0.000000e+00 : f32
    %65 = vector.broadcast %cst_39 : f32 to vector<64x128xf32>
    %66 = arith.maximumf %64, %65 : vector<64x128xf32>
    %67 = arith.truncf %66 : vector<64x128xf32> to vector<64x128xbf16>
    %c0_40 = arith.constant 0 : index
    %c0_41 = arith.constant 0 : index
    %68 = vector.load %arg5[%c0_40, %c0_41] : memref<128x128xbf16, #tpu.memory_space<vmem>>, vector<128x128xbf16>
    %cst_42 = arith.constant dense<0.000000e+00> : vector<64x128xf32>
    %69 = tpu.matmul %67, %68, %cst_42 {dimension_numbers = #tpu.dot_dimension_numbers<[1], [0], [0], [1], [0, 0, 1, 1], [], []>} : vector<64x128xbf16>, vector<128x128xbf16>, vector<64x128xf32> -> vector<64x128xf32>
    %c0_43 = arith.constant 0 : index
    %c0_44 = arith.constant 0 : index
    %70 = vector.load %arg6[%c0_43, %c0_44] : memref<1x128xf32, #tpu.memory_space<vmem>>, vector<1x128xf32>
    %71 = vector.broadcast %70 : vector<1x128xf32> to vector<64x128xf32>
    %72 = arith.addf %69, %71 : vector<64x128xf32>
    %c0_45 = arith.constant 0 : index
    %c0_46 = arith.constant 0 : index
    %73 = vector.load %arg7[%c0_45, %c0_46] : memref<64x128xf32, #tpu.memory_space<vmem>>, vector<64x128xf32>
    tpu.vector_store %arg7[%c0_45, %c0_46], %72 {strides = array<i32>} : memref<64x128xf32, #tpu.memory_space<vmem>>, vector<64x128xf32>,
    return
  }
}

</mosaic_0001>

<llo_original>
// kernel: tpu_custom_call.1
$region0: #{tpu_custom_call.1}
  #allocation0 [shape = 'u32[]', space=smem, size = 0x4, offset = 0x4, fixed_abs, tag = 'smem constant byte address 0x4 - core index']
  #allocation1 [shape = 'u32[72,128]{1,0:T(1,128)}', space=vmem, size = 0x9000, scoped, tag = 'internal scratch']
  %s0 = inlined_call_operand.hbm [shape: f32[64,128], index: 0, kind: input, shape index: {}]
  %s1 = inlined_call_operand.hbm [shape: bf16[64,64], index: 1, kind: input, shape index: {}]
  %s2 = inlined_call_operand.hbm [shape: bf16[128,128], index: 2, kind: input, shape index: {}]
  %s3 = inlined_call_operand.vmem [shape: f32[1,128], index: 3, kind: input, shape index: {}]
  %s4 = inlined_call_operand.hbm [shape: bf16[4,128,128], index: 4, kind: input, shape index: {}]
  %s5 = inlined_call_operand.hbm [shape: bf16[128,128], index: 5, kind: input, shape index: {}]
  %s6 = inlined_call_operand.vmem [shape: f32[1,128], index: 6, kind: input, shape index: {}]
  %s7 = inlined_call_operand.hbm [shape: f32[64,128], index: 7, kind: output, shape index: {}]
  %s8 = sld [smem:[#allocation0]]
  $region58: #{tpu_custom_call.1} parent=0
    _
  %s10 = ssub.s32 1, %s8
  %s11 = scalar_select 0, %s10, %s8
  $region1: #{tpu_custom_call.1} parent=0
    #allocation2 [shape = 'u8[32768]{0}', space=vmem, size = 0x8000, scoped, tag = 'input window, operand 0, single buffered']
    #allocation3 [shape = 's32[1]{0}', space=sflag, size = 0x4, scoped, tag = 'scoped memory for tpu_custom_call.1']
    #allocation4 [shape = 's32[1]{0}', space=sflag, size = 0x4, scoped, tag = 'scoped memory for tpu_custom_call.1']
    #allocation5 [shape = 'u8[16384]{0}', space=vmem, size = 0x4000, scoped, tag = 'input window, operand 1, single buffered']
    #allocation6 [shape = 's32[1]{0}', space=sflag, size = 0x4, scoped, tag = 'scoped memory for tpu_custom_call.1']
    #allocation7 [shape = 'u8[32768]{0}', space=vmem, size = 0x8000, scoped, tag = 'input window, operand 2, single buffered']
    #allocation8 [shape = 'u8[131072]{0}', space=vmem, size = 0x20000, scoped, tag = 'input window, operand 4, single buffered']
    #allocation9 [shape = 's32[1]{0}', space=sflag, size = 0x4, scoped, tag = 'scoped memory for tpu_custom_call.1']
    #allocation10 [shape = 'u8[32768]{0}', space=vmem, size = 0x8000, scoped, tag = 'input window, operand 5, single buffered']
    #allocation11 [shape = 'u8[32768]{0}', space=vmem, size = 0x8000, scoped, tag = 'output window, operand 0, single buffered']
    %12 = vsyncpa [#allocation3], 0
    %13 = vsyncpa [#allocation6], 0
    %14 = vsyncpa [#allocation9], 0
    %15 = vsyncpa [#allocation4], 0
    // Predicated region
    $region2: #{tpu_custom_call.1} parent=1 // pred_check
      _
    $region3: #{tpu_custom_call.1} parent=1 // pred_check_branch
      %17 = sbr.rel (0) target = $region5
    $region4: #{tpu_custom_call.1} parent=1 // pred_region
      %19 = vsyncadd [#allocation3], 0
      %s20 = sshll.u32 %s0, 4
      %s21 = int_to_ptr.hbm [resolvable:$true] %s20
      %s22 = sshll.u32 [#allocation2], 4
      %s23 = int_to_ptr.vmem [resolvable:$true] %s22
      %28 = dma.hbm_to_vmem [thread:$0]  %s21, 1024, %s23, [#allocation3], 128, 128, 8
    $region5: #{tpu_custom_call.1} parent=1 // pred_fallthru
      _
    // Predicated region
    $region6: #{tpu_custom_call.1} parent=1 // pred_check
      _
    $region7: #{tpu_custom_call.1} parent=1 // pred_check_branch
      %30 = sbr.rel (0) target = $region9
    $region8: #{tpu_custom_call.1} parent=1 // pred_region
      %32 = vsyncadd [#allocation6], 0
      %s33 = sshll.u32 %s1, 4
      %s34 = int_to_ptr.hbm [resolvable:$true] %s33
      %s35 = sshll.u32 [#allocation5], 4
      %s36 = int_to_ptr.vmem [resolvable:$true] %s35
      %41 = dma.hbm_to_vmem [thread:$0]  %s34, 512, %s36, [#allocation6], 64, 64, 4
    $region9: #{tpu_custom_call.1} parent=1 // pred_fallthru
      _
    // Predicated region
    $region10: #{tpu_custom_call.1} parent=1 // pred_check
      _
    $region11: #{tpu_custom_call.1} parent=1 // pred_check_branch
      %43 = sbr.rel (0) target = $region13
    $region12: #{tpu_custom_call.1} parent=1 // pred_region
      %45 = vsyncadd [#allocation6], 0
      %s46 = sshll.u32 %s2, 4
      %s47 = int_to_ptr.hbm [resolvable:$true] %s46
      %s48 = sshll.u32 [#allocation7], 4
      %s49 = int_to_ptr.vmem [resolvable:$true] %s48
      %54 = dma.hbm_to_vmem [thread:$0]  %s47, 1024, %s49, [#allocation6], 64, 64, 4
    $region13: #{tpu_custom_call.1} parent=1 // pred_fallthru
      _
    // Predicated region
    $region14: #{tpu_custom_call.1} parent=1 // pred_check
      _
    $region15: #{tpu_custom_call.1} parent=1 // pred_check_branch
      %56 = sbr.rel (0) target = $region17
    $region16: #{tpu_custom_call.1} parent=1 // pred_region
      _
    $region17: #{tpu_custom_call.1} parent=1 // pred_fallthru
      _
    // Predicated region
    $region18: #{tpu_custom_call.1} parent=1 // pred_check
      _
    $region19: #{tpu_custom_call.1} parent=1 // pred_check_branch
      %58 = sbr.rel (0) target = $region21
    $region20: #{tpu_custom_call.1} parent=1 // pred_region
      %60 = vsyncadd [#allocation9], 0
      %s61 = sshll.u32 %s4, 4
      %s62 = int_to_ptr.hbm [resolvable:$true] %s61
      %s63 = sshll.u32 [#allocation8], 4
      %s64 = int_to_ptr.vmem [resolvable:$true] %s63
      %69 = dma.hbm_to_vmem [thread:$0]  %s62, 4096, %s64, [#allocation9], 64, 64, 4
    $region21: #{tpu_custom_call.1} parent=1 // pred_fallthru
      _
    // Predicated region
    $region22: #{tpu_custom_call.1} parent=1 // pred_check
      _
    $region23: #{tpu_custom_call.1} parent=1 // pred_check_branch
      %71 = sbr.rel (0) target = $region25
    $region24: #{tpu_custom_call.1} parent=1 // pred_region
      %73 = vsyncadd [#allocation9], 0
      %s74 = sshll.u32 %s5, 4
      %s75 = int_to_ptr.hbm [resolvable:$true] %s74
      %s76 = sshll.u32 [#allocation10], 4
      %s77 = int_to_ptr.vmem [resolvable:$true] %s76
      %82 = dma.hbm_to_vmem [thread:$0]  %s75, 1024, %s77, [#allocation9], 64, 64, 4
    $region25: #{tpu_custom_call.1} parent=1 // pred_fallthru
      _
    // Predicated region
    $region26: #{tpu_custom_call.1} parent=1 // pred_check
      _
    $region27: #{tpu_custom_call.1} parent=1 // pred_check_branch
      %84 = sbr.rel (0) target = $region29
    $region28: #{tpu_custom_call.1} parent=1 // pred_region
      _
    $region29: #{tpu_custom_call.1} parent=1 // pred_fallthru
      _
    // Predicated region
    $region30: #{tpu_custom_call.1} parent=1 // pred_check
      _
    $region31: #{tpu_custom_call.1} parent=1 // pred_check_branch
      %86 = sbr.rel (0) target = $region33
    $region32: #{tpu_custom_call.1} parent=1 // pred_region
      %88 = dma.done [#allocation3], 1024
    $region33: #{tpu_custom_call.1} parent=1 // pred_fallthru
      _
    // Predicated region
    $region34: #{tpu_custom_call.1} parent=1 // pred_check
      _
    $region35: #{tpu_custom_call.1} parent=1 // pred_check_branch
      %90 = sbr.rel (0) target = $region37
    $region36: #{tpu_custom_call.1} parent=1 // pred_region
      %92 = dma.done [#allocation6], 512
    $region37: #{tpu_custom_call.1} parent=1 // pred_fallthru
      _
    // Predicated region
    $region38: #{tpu_custom_call.1} parent=1 // pred_check
      _
    $region39: #{tpu_custom_call.1} parent=1 // pred_check_branch
      %94 = sbr.rel (0) target = $region41
    $region40: #{tpu_custom_call.1} parent=1 // pred_region
      %96 = dma.done [#allocation6], 1024
    $region41: #{tpu_custom_call.1} parent=1 // pred_fallthru
      _
    // Predicated region
    $region42: #{tpu_custom_call.1} parent=1 // pred_check
      _
    $region43: #{tpu_custom_call.1} parent=1 // pred_check_branch
      %98 = sbr.rel (0) target = $region45
    $region44: #{tpu_custom_call.1} parent=1 // pred_region
      %100 = dma.done [#allocation9], 4096
    $region45: #{tpu_custom_call.1} parent=1 // pred_fallthru
      _
    // Predicated region
    $region46: #{tpu_custom_call.1} parent=1 // pred_check
      _
    $region47: #{tpu_custom_call.1} parent=1 // pred_check_branch
      %102 = sbr.rel (0) target = $region49
    $region48: #{tpu_custom_call.1} parent=1 // pred_region
      %104 = dma.done [#allocation9], 1024
    $region49: #{tpu_custom_call.1} parent=1 // pred_fallthru
      _
    %v106 = vld [vmem:[#allocation2] sm:$0xff]
    %v107 = vld [vmem:[#allocation2 + $0x8] sm:$0xff]
    %v108 = vld [vmem:[#allocation2 + $0x10] sm:$0xff]
    %v109 = vld [vmem:[#allocation2 + $0x18] sm:$0xff]
    %v110 = vld [vmem:[#allocation2 + $0x20] sm:$0xff]
    %v111 = vld [vmem:[#allocation2 + $0x28] sm:$0xff]
    %v112 = vld [vmem:[#allocation2 + $0x30] sm:$0xff]
    %v113 = vld [vmem:[#allocation2 + $0x38] sm:$0xff]
    %v114 = vpack.c.bf16 %v107, %v106
    %v115 = vpack.c.bf16 %v109, %v108
    %v116 = vpack.c.bf16 %v111, %v110
    %v117 = vpack.c.bf16 %v113, %v112
    %v118 = vld [vmem:[#allocation7] sm:$0xf]
    %v119 = vld [vmem:[#allocation7 + $0x4] sm:$0xf]
    %v120 = vld [vmem:[#allocation7 + $0x8] sm:$0xf]
    %v121 = vld [vmem:[#allocation7 + $0xc] sm:$0xf]
    %v122 = vld [vmem:[#allocation7 + $0x10] sm:$0xf]
    %v123 = vld [vmem:[#allocation7 + $0x14] sm:$0xf]
    %v124 = vld [vmem:[#allocation7 + $0x18] sm:$0xf]
    %v125 = vld [vmem:[#allocation7 + $0x1c] sm:$0xf]
    %v126 = vld [vmem:[#allocation7 + $0x20] sm:$0xf]
    %v127 = vld [vmem:[#allocation7 + $0x24] sm:$0xf]
    %v128 = vld [vmem:[#allocation7 + $0x28] sm:$0xf]
    %v129 = vld [vmem:[#allocation7 + $0x2c] sm:$0xf]
    %v130 = vld [vmem:[#allocation7 + $0x30] sm:$0xf]
    %v131 = vld [vmem:[#allocation7 + $0x34] sm:$0xf]
    %v132 = vld [vmem:[#allocation7 + $0x38] sm:$0xf]
    %v133 = vld [vmem:[#allocation7 + $0x3c] sm:$0xf]
    %v134 = vld [vmem:[%s3] sm:$0x1]
    %v136 = vperm.slane %v134, 0
    %v154 = vunpack.c.l.b16 %v118
    %v155 = vunpack.c.l.b16 %v119
    %v156 = vunpack.c.l.b16 %v120
    %v157 = vunpack.c.l.b16 %v121
    %v158 = vunpack.c.l.b16 %v122
    %v159 = vunpack.c.l.b16 %v123
    %v160 = vunpack.c.l.b16 %v124
    %v161 = vunpack.c.l.b16 %v125
    %v162 = vunpack.c.l.b16 %v126
    %v163 = vunpack.c.l.b16 %v127
    %v164 = vunpack.c.l.b16 %v128
    %v165 = vunpack.c.l.b16 %v129
    %v166 = vunpack.c.l.b16 %v130
    %v167 = vunpack.c.l.b16 %v131
    %v168 = vunpack.c.l.b16 %v132
    %v169 = vunpack.c.l.b16 %v133
    %v170 = vpack.c.b16 %v155, %v154
    %v171 = vpack.c.b16 %v157, %v156
    %v172 = vpack.c.b16 %v159, %v158
    %v173 = vpack.c.b16 %v161, %v160
    %v174 = vpack.c.b16 %v163, %v162
    %v175 = vpack.c.b16 %v165, %v164
    %v176 = vpack.c.b16 %v167, %v166
    %v177 = vpack.c.b16 %v169, %v168
    %186 = vmatpush.bf16.msra.mxu0 %v177
    %187 = vmatpush.bf16.msra.mxu0 %v176
    %188 = vmatpush.bf16.msra.mxu0 %v175
    %189 = vmatpush.bf16.msra.mxu0 %v174
    %190 = vmatpush.bf16.msra.mxu0 %v173
    %191 = vmatpush.bf16.msra.mxu0 %v172
    %192 = vmatpush.bf16.msra.mxu0 %v171
    %193 = vmatpush.bf16.msra.mxu0 %v170
    %194 = vmatmul.bf16.gmra.mxu0 %v114
    %v195 = vpop.f32.mrf.mxu0
    %v196 = vadd.f32 %v136, %v195
    %v197 = vpop.f32.mrf.mxu0
    %v198 = vadd.f32 %v136, %v197
    %199 = vmatmul.bf16.gmra.mxu0 %v115
    %v200 = vpop.f32.mrf.mxu0
    %v201 = vadd.f32 %v136, %v200
    %v202 = vpop.f32.mrf.mxu0
    %v203 = vadd.f32 %v136, %v202
    %204 = vmatmul.bf16.gmra.mxu0 %v116
    %v205 = vpop.f32.mrf.mxu0
    %v206 = vadd.f32 %v136, %v205
    %v207 = vpop.f32.mrf.mxu0
    %v208 = vadd.f32 %v136, %v207
    %209 = vmatmul.bf16.gmra.mxu0 %v117
    %v210 = vpop.f32.mrf.mxu0
    %v211 = vadd.f32 %v136, %v210
    %v212 = vpop.f32.mrf.mxu0
    %v213 = vadd.f32 %v136, %v212
    %214 = vdwg.mxu0
    %v215 = vmax.f32 %v196, 0.0
    %v216 = vmax.f32 %v198, 0.0
    %v217 = vmax.f32 %v201, 0.0
    %v218 = vmax.f32 %v203, 0.0
    %v219 = vmax.f32 %v206, 0.0
    %v220 = vmax.f32 %v208, 0.0
    %v221 = vmax.f32 %v211, 0.0
    %v222 = vmax.f32 %v213, 0.0
    %v223 = vmul.f32 %v215, 0.5
    %v224 = vmul.f32 %v216, 0.5
    %v225 = vmul.f32 %v217, 0.5
    %v226 = vmul.f32 %v218, 0.5
    %v227 = vmul.f32 %v219, 0.5
    %v228 = vmul.f32 %v220, 0.5
    %v229 = vmul.f32 %v221, 0.5
    %v230 = vmul.f32 %v222, 0.5
    %v231 = vld [vmem:[#allocation5] sm:$0xf]
    %v232 = vld [vmem:[#allocation5 + $0x4] sm:$0xf]
    %v233 = vld [vmem:[#allocation5 + $0x8] sm:$0xf]
    %v234 = vld [vmem:[#allocation5 + $0xc] sm:$0xf]
    %v235 = vld [vmem:[#allocation5 + $0x10] sm:$0xf]
    %v236 = vld [vmem:[#allocation5 + $0x14] sm:$0xf]
    %v237 = vld [vmem:[#allocation5 + $0x18] sm:$0xf]
    %v238 = vld [vmem:[#allocation5 + $0x1c] sm:$0xf]
    %v239 = vpack.c.bf16 %v216, %v215
    %v240 = vpack.c.bf16 %v218, %v217
    %v241 = vpack.c.bf16 %v220, %v219
    %v242 = vpack.c.bf16 %v222, %v221
    %v251 = vunpack.c.l.b16 %v231
    %v252 = vunpack.c.l.b16 %v232
    %v253 = vunpack.c.l.b16 %v233
    %v254 = vunpack.c.l.b16 %v234
    %v255 = vunpack.c.l.b16 %v235
    %v256 = vunpack.c.l.b16 %v236
    %v257 = vunpack.c.l.b16 %v237
    %v258 = vunpack.c.l.b16 %v238
    %v259 = vpack.c.b16 %v252, %v251
    %v260 = vpack.c.b16 %v254, %v253
    %v261 = vpack.c.b16 %v256, %v255
    %v262 = vpack.c.b16 %v258, %v257
    %vm263 = vcmask 523264
    %v265 = vsel %vm263, %v259, 0
    %v268 = vsel %vm263, %v260, 0
    %v271 = vsel %vm263, %v261, 0
    %v274 = vsel %vm263, %v262, 0
    %276 = vmatpush.bf16.msra.mxu0 0
    %277 = vmatpush.bf16.msra.mxu0 0
    %278 = vmatpush.bf16.msra.mxu0 0
    %279 = vmatpush.bf16.msra.mxu0 0
    %280 = vmatpush.bf16.msra.mxu0 %v242
    %281 = vmatpush.bf16.msra.mxu0 %v241
    %282 = vmatpush.bf16.msra.mxu0 %v240
    %283 = vmatpush.bf16.msra.mxu0 %v239
    %284 = vmatmul.bf16.gmra.mxu0 %v265
    %v285 = vpop.f32.mrf.mxu0
    %v286 = vadd.f32 %v223, %v285
    %v287 = vpop.f32.mrf.mxu0
    %v288 = vadd.f32 %v224, %v287
    %289 = vmatmul.bf16.gmra.mxu0 %v268
    %v290 = vpop.f32.mrf.mxu0
    %v291 = vadd.f32 %v225, %v290
    %v292 = vpop.f32.mrf.mxu0
    %v293 = vadd.f32 %v226, %v292
    %294 = vmatmul.bf16.gmra.mxu0 %v271
    %v295 = vpop.f32.mrf.mxu0
    %v296 = vadd.f32 %v227, %v295
    %v297 = vpop.f32.mrf.mxu0
    %v298 = vadd.f32 %v228, %v297
    %299 = vmatmul.bf16.gmra.mxu0 %v274
    %v300 = vpop.f32.mrf.mxu0
    %v301 = vadd.f32 %v229, %v300
    %v302 = vpop.f32.mrf.mxu0
    %v303 = vadd.f32 %v230, %v302
    %304 = vdwg.mxu0
    %v305 = vpack.c.bf16 %v288, %v286
    %v306 = vpack.c.bf16 %v293, %v291
    %v307 = vpack.c.bf16 %v298, %v296
    %v308 = vpack.c.bf16 %v303, %v301
    %v309 = vld [vmem:[#allocation8] sm:$0xf]
    %v310 = vld [vmem:[#allocation8 + $0x4] sm:$0xf]
    %v311 = vld [vmem:[#allocation8 + $0x8] sm:$0xf]
    %v312 = vld [vmem:[#allocation8 + $0xc] sm:$0xf]
    %v313 = vld [vmem:[#allocation8 + $0x10] sm:$0xf]
    %v314 = vld [vmem:[#allocation8 + $0x14] sm:$0xf]
    %v315 = vld [vmem:[#allocation8 + $0x18] sm:$0xf]
    %v316 = vld [vmem:[#allocation8 + $0x1c] sm:$0xf]
    %v317 = vld [vmem:[#allocation8 + $0x20] sm:$0xf]
    %v318 = vld [vmem:[#allocation8 + $0x24] sm:$0xf]
    %v319 = vld [vmem:[#allocation8 + $0x28] sm:$0xf]
    %v320 = vld [vmem:[#allocation8 + $0x2c] sm:$0xf]
    %v321 = vld [vmem:[#allocation8 + $0x30] sm:$0xf]
    %v322 = vld [vmem:[#allocation8 + $0x34] sm:$0xf]
    %v323 = vld [vmem:[#allocation8 + $0x38] sm:$0xf]
    %v324 = vld [vmem:[#allocation8 + $0x3c] sm:$0xf]
    %v341 = vunpack.c.l.b16 %v309
    %v342 = vunpack.c.l.b16 %v310
    %v343 = vunpack.c.l.b16 %v311
    %v344 = vunpack.c.l.b16 %v312
    %v345 = vunpack.c.l.b16 %v313
    %v346 = vunpack.c.l.b16 %v314
    %v347 = vunpack.c.l.b16 %v315
    %v348 = vunpack.c.l.b16 %v316
    %v349 = vunpack.c.l.b16 %v317
    %v350 = vunpack.c.l.b16 %v318
    %v351 = vunpack.c.l.b16 %v319
    %v352 = vunpack.c.l.b16 %v320
    %v353 = vunpack.c.l.b16 %v321
    %v354 = vunpack.c.l.b16 %v322
    %v355 = vunpack.c.l.b16 %v323
    %v356 = vunpack.c.l.b16 %v324
    %v357 = vpack.c.b16 %v342, %v341
    %v358 = vpack.c.b16 %v344, %v343
    %v359 = vpack.c.b16 %v346, %v345
    %v360 = vpack.c.b16 %v348, %v347
    %v361 = vpack.c.b16 %v350, %v349
    %v362 = vpack.c.b16 %v352, %v351
    %v363 = vpack.c.b16 %v354, %v353
    %v364 = vpack.c.b16 %v356, %v355
    %373 = vmatpush.bf16.msra.mxu0 %v364
    %374 = vmatpush.bf16.msra.mxu0 %v363
    %375 = vmatpush.bf16.msra.mxu0 %v362
    %376 = vmatpush.bf16.msra.mxu0 %v361
    %377 = vmatpush.bf16.msra.mxu0 %v360
    %378 = vmatpush.bf16.msra.mxu0 %v359
    %379 = vmatpush.bf16.msra.mxu0 %v358
    %380 = vmatpush.bf16.msra.mxu0 %v357
    %381 = vmatmul.bf16.gmra.mxu0 %v305
    %v382 = vpop.f32.mrf.mxu0
    %v383 = vadd.f32 0.0, %v382
    %v384 = vpop.f32.mrf.mxu0
    %v385 = vadd.f32 0.0, %v384
    %386 = vmatmul.bf16.gmra.mxu0 %v306
    %v387 = vpop.f32.mrf.mxu0
    %v388 = vadd.f32 0.0, %v387
    %v389 = vpop.f32.mrf.mxu0
    %v390 = vadd.f32 0.0, %v389
    %391 = vmatmul.bf16.gmra.mxu0 %v307
    %v392 = vpop.f32.mrf.mxu0
    %v393 = vadd.f32 0.0, %v392
    %v394 = vpop.f32.mrf.mxu0
    %v395 = vadd.f32 0.0, %v394
    %396 = vmatmul.bf16.gmra.mxu0 %v308
    %v397 = vpop.f32.mrf.mxu0
    %v398 = vadd.f32 0.0, %v397
    %v399 = vpop.f32.mrf.mxu0
    %v400 = vadd.f32 0.0, %v399
    %401 = vdwg.mxu0
    %v402 = vmul.f32 %v286, 0.30685282
    %v403 = vmul.f32 %v288, 0.30685282
    %v404 = vmul.f32 %v291, 0.30685282
    %v405 = vmul.f32 %v293, 0.30685282
    %v406 = vmul.f32 %v296, 0.30685282
    %v407 = vmul.f32 %v298, 0.30685282
    %v408 = vmul.f32 %v301, 0.30685282
    %v409 = vmul.f32 %v303, 0.30685282
    %v410 = vadd.f32 %v402, %v383
    %v411 = vadd.f32 %v403, %v385
    %v412 = vadd.f32 %v404, %v388
    %v413 = vadd.f32 %v405, %v390
    %v414 = vadd.f32 %v406, %v393
    %v415 = vadd.f32 %v407, %v395
    %v416 = vadd.f32 %v408, %v398
    %v417 = vadd.f32 %v409, %v400
    %v418 = vadd.f32 %v410, %v215
    %v419 = vadd.f32 %v411, %v216
    %v420 = vadd.f32 %v412, %v217
    %v421 = vadd.f32 %v413, %v218
    %v422 = vadd.f32 %v414, %v219
    %v423 = vadd.f32 %v415, %v220
    %v424 = vadd.f32 %v416, %v221
    %v425 = vadd.f32 %v417, %v222
    %v426 = vmax.f32 %v418, 0.0
    %v427 = vmax.f32 %v419, 0.0
    %v428 = vmax.f32 %v420, 0.0
    %v429 = vmax.f32 %v421, 0.0
    %v430 = vmax.f32 %v422, 0.0
    %v431 = vmax.f32 %v423, 0.0
    %v432 = vmax.f32 %v424, 0.0
    %v433 = vmax.f32 %v425, 0.0
    %v434 = vpack.c.bf16 %v427, %v426
    %v435 = vpack.c.bf16 %v429, %v428
    %v436 = vpack.c.bf16 %v431, %v430
    %v437 = vpack.c.bf16 %v433, %v432
    %438 = vmatpush.bf16.msra.mxu0 0
    %439 = vmatpush.bf16.msra.mxu0 0
    %440 = vmatpush.bf16.msra.mxu0 0
    %441 = vmatpush.bf16.msra.mxu0 0
    %442 = vmatpush.bf16.msra.mxu0 %v437
    %443 = vmatpush.bf16.msra.mxu0 %v436
    %444 = vmatpush.bf16.msra.mxu0 %v435
    %445 = vmatpush.bf16.msra.mxu0 %v434
    %446 = vmatmul.bf16.gmra.mxu0 %v265
    %v447 = vpop.f32.mrf.mxu0
    %v448 = vadd.f32 %v223, %v447
    %v449 = vpop.f32.mrf.mxu0
    %v450 = vadd.f32 %v224, %v449
    %451 = vmatmul.bf16.gmra.mxu0 %v268
    %v452 = vpop.f32.mrf.mxu0
    %v453 = vadd.f32 %v225, %v452
    %v454 = vpop.f32.mrf.mxu0
    %v455 = vadd.f32 %v226, %v454
    %456 = vmatmul.bf16.gmra.mxu0 %v271
    %v457 = vpop.f32.mrf.mxu0
    %v458 = vadd.f32 %v227, %v457
    %v459 = vpop.f32.mrf.mxu0
    %v460 = vadd.f32 %v228, %v459
    %461 = vmatmul.bf16.gmra.mxu0 %v274
    %v462 = vpop.f32.mrf.mxu0
    %v463 = vadd.f32 %v229, %v462
    %v464 = vpop.f32.mrf.mxu0
    %v465 = vadd.f32 %v230, %v464
    %466 = vdwg.mxu0
    %v467 = vpack.c.bf16 %v450, %v448
    %v468 = vpack.c.bf16 %v455, %v453
    %v469 = vpack.c.bf16 %v460, %v458
    %v470 = vpack.c.bf16 %v465, %v463
    %s471 = scalar_lea.vmem [#allocation8], 64
    %v472 = vld [vmem:[%s471] sm:$0xf]
    %v473 = vld [vmem:[%s471 + $0x4] sm:$0xf]
    %v474 = vld [vmem:[%s471 + $0x8] sm:$0xf]
    %v475 = vld [vmem:[%s471 + $0xc] sm:$0xf]
    %v476 = vld [vmem:[%s471 + $0x10] sm:$0xf]
    %v477 = vld [vmem:[%s471 + $0x14] sm:$0xf]
    %v478 = vld [vmem:[%s471 + $0x18] sm:$0xf]
    %v479 = vld [vmem:[%s471 + $0x1c] sm:$0xf]
    %v480 = vld [vmem:[%s471 + $0x20] sm:$0xf]
    %v481 = vld [vmem:[%s471 + $0x24] sm:$0xf]
    %v482 = vld [vmem:[%s471 + $0x28] sm:$0xf]
    %v483 = vld [vmem:[%s471 + $0x2c] sm:$0xf]
    %v484 = vld [vmem:[%s471 + $0x30] sm:$0xf]
    %v485 = vld [vmem:[%s471 + $0x34] sm:$0xf]
    %v486 = vld [vmem:[%s471 + $0x38] sm:$0xf]
    %v487 = vld [vmem:[%s471 + $0x3c] sm:$0xf]
    %v504 = vunpack.c.l.b16 %v472
    %v505 = vunpack.c.l.b16 %v473
    %v506 = vunpack.c.l.b16 %v474
    %v507 = vunpack.c.l.b16 %v475
    %v508 = vunpack.c.l.b16 %v476
    %v509 = vunpack.c.l.b16 %v477
    %v510 = vunpack.c.l.b16 %v478
    %v511 = vunpack.c.l.b16 %v479
    %v512 = vunpack.c.l.b16 %v480
    %v513 = vunpack.c.l.b16 %v481
    %v514 = vunpack.c.l.b16 %v482
    %v515 = vunpack.c.l.b16 %v483
    %v516 = vunpack.c.l.b16 %v484
    %v517 = vunpack.c.l.b16 %v485
    %v518 = vunpack.c.l.b16 %v486
    %v519 = vunpack.c.l.b16 %v487
    %v520 = vpack.c.b16 %v505, %v504
    %v521 = vpack.c.b16 %v507, %v506
    %v522 = vpack.c.b16 %v509, %v508
    %v523 = vpack.c.b16 %v511, %v510
    %v524 = vpack.c.b16 %v513, %v512
    %v525 = vpack.c.b16 %v515, %v514
    %v526 = vpack.c.b16 %v517, %v516
    %v527 = vpack.c.b16 %v519, %v518
    %536 = vmatpush.bf16.msra.mxu0 %v527
    %537 = vmatpush.bf16.msra.mxu0 %v526
    %538 = vmatpush.bf16.msra.mxu0 %v525
    %539 = vmatpush.bf16.msra.mxu0 %v524
    %540 = vmatpush.bf16.msra.mxu0 %v523
    %541 = vmatpush.bf16.msra.mxu0 %v522
    %542 = vmatpush.bf16.msra.mxu0 %v521
    %543 = vmatpush.bf16.msra.mxu0 %v520
    %544 = vmatmul.bf16.gmra.mxu0 %v467
    %v545 = vpop.f32.mrf.mxu0
    %v546 = vadd.f32 0.0, %v545
    %v547 = vpop.f32.mrf.mxu0
    %v548 = vadd.f32 0.0, %v547
    %549 = vmatmul.bf16.gmra.mxu0 %v468
    %v550 = vpop.f32.mrf.mxu0
    %v551 = vadd.f32 0.0, %v550
    %v552 = vpop.f32.mrf.mxu0
    %v553 = vadd.f32 0.0, %v552
    %554 = vmatmul.bf16.gmra.mxu0 %v469
    %v555 = vpop.f32.mrf.mxu0
    %v556 = vadd.f32 0.0, %v555
    %v557 = vpop.f32.mrf.mxu0
    %v558 = vadd.f32 0.0, %v557
    %559 = vmatmul.bf16.gmra.mxu0 %v470
    %v560 = vpop.f32.mrf.mxu0
    %v561 = vadd.f32 0.0, %v560
    %v562 = vpop.f32.mrf.mxu0
    %v563 = vadd.f32 0.0, %v562
    %564 = vdwg.mxu0
    %v565 = vmul.f32 %v448, 0.5945349
    %v566 = vmul.f32 %v450, 0.5945349
    %v567 = vmul.f32 %v453, 0.5945349
    %v568 = vmul.f32 %v455, 0.5945349
    %v569 = vmul.f32 %v458, 0.5945349
    %v570 = vmul.f32 %v460, 0.5945349
    %v571 = vmul.f32 %v463, 0.5945349
    %v572 = vmul.f32 %v465, 0.5945349
    %v573 = vadd.f32 %v565, %v546
    %v574 = vadd.f32 %v566, %v548
    %v575 = vadd.f32 %v567, %v551
    %v576 = vadd.f32 %v568, %v553
    %v577 = vadd.f32 %v569, %v556
    %v578 = vadd.f32 %v570, %v558
    %v579 = vadd.f32 %v571, %v561
    %v580 = vadd.f32 %v572, %v563
    %v581 = vadd.f32 %v573, %v426
    %v582 = vadd.f32 %v574, %v427
    %v583 = vadd.f32 %v575, %v428
    %v584 = vadd.f32 %v576, %v429
    %v585 = vadd.f32 %v577, %v430
    %v586 = vadd.f32 %v578, %v431
    %v587 = vadd.f32 %v579, %v432
    %v588 = vadd.f32 %v580, %v433
    %v589 = vmax.f32 %v581, 0.0
    %v590 = vmax.f32 %v582, 0.0
    %v591 = vmax.f32 %v583, 0.0
    %v592 = vmax.f32 %v584, 0.0
    %v593 = vmax.f32 %v585, 0.0
    %v594 = vmax.f32 %v586, 0.0
    %v595 = vmax.f32 %v587, 0.0
    %v596 = vmax.f32 %v588, 0.0
    %v597 = vpack.c.bf16 %v590, %v589
    %v598 = vpack.c.bf16 %v592, %v591
    %v599 = vpack.c.bf16 %v594, %v593
    %v600 = vpack.c.bf16 %v596, %v595
    %601 = vmatpush.bf16.msra.mxu0 0
    %602 = vmatpush.bf16.msra.mxu0 0
    %603 = vmatpush.bf16.msra.mxu0 0
    %604 = vmatpush.bf16.msra.mxu0 0
    %605 = vmatpush.bf16.msra.mxu0 %v600
    %606 = vmatpush.bf16.msra.mxu0 %v599
    %607 = vmatpush.bf16.msra.mxu0 %v598
    %608 = vmatpush.bf16.msra.mxu0 %v597
    %609 = vmatmul.bf16.gmra.mxu0 %v265
    %v610 = vpop.f32.mrf.mxu0
    %v611 = vadd.f32 %v223, %v610
    %v612 = vpop.f32.mrf.mxu0
    %v613 = vadd.f32 %v224, %v612
    %614 = vmatmul.bf16.gmra.mxu0 %v268
    %v615 = vpop.f32.mrf.mxu0
    %v616 = vadd.f32 %v225, %v615
    %v617 = vpop.f32.mrf.mxu0
    %v618 = vadd.f32 %v226, %v617
    %619 = vmatmul.bf16.gmra.mxu0 %v271
    %v620 = vpop.f32.mrf.mxu0
    %v621 = vadd.f32 %v227, %v620
    %v622 = vpop.f32.mrf.mxu0
    %v623 = vadd.f32 %v228, %v622
    %624 = vmatmul.bf16.gmra.mxu0 %v274
    %v625 = vpop.f32.mrf.mxu0
    %v626 = vadd.f32 %v229, %v625
    %v627 = vpop.f32.mrf.mxu0
    %v628 = vadd.f32 %v230, %v627
    %629 = vdwg.mxu0
    %v630 = vpack.c.bf16 %v613, %v611
    %v631 = vpack.c.bf16 %v618, %v616
    %v632 = vpack.c.bf16 %v623, %v621
    %v633 = vpack.c.bf16 %v628, %v626
    %s634 = scalar_lea.vmem [#allocation8], 128
    %v635 = vld [vmem:[%s634] sm:$0xf]
    %v636 = vld [vmem:[%s634 + $0x4] sm:$0xf]
    %v637 = vld [vmem:[%s634 + $0x8] sm:$0xf]
    %v638 = vld [vmem:[%s634 + $0xc] sm:$0xf]
    %v639 = vld [vmem:[%s634 + $0x10] sm:$0xf]
    %v640 = vld [vmem:[%s634 + $0x14] sm:$0xf]
    %v641 = vld [vmem:[%s634 + $0x18] sm:$0xf]
    %v642 = vld [vmem:[%s634 + $0x1c] sm:$0xf]
    %v643 = vld [vmem:[%s634 + $0x20] sm:$0xf]
    %v644 = vld [vmem:[%s634 + $0x24] sm:$0xf]
    %v645 = vld [vmem:[%s634 + $0x28] sm:$0xf]
    %v646 = vld [vmem:[%s634 + $0x2c] sm:$0xf]
    %v647 = vld [vmem:[%s634 + $0x30] sm:$0xf]
    %v648 = vld [vmem:[%s634 + $0x34] sm:$0xf]
    %v649 = vld [vmem:[%s634 + $0x38] sm:$0xf]
    %v650 = vld [vmem:[%s634 + $0x3c] sm:$0xf]
    %v667 = vunpack.c.l.b16 %v635
    %v668 = vunpack.c.l.b16 %v636
    %v669 = vunpack.c.l.b16 %v637
    %v670 = vunpack.c.l.b16 %v638
    %v671 = vunpack.c.l.b16 %v639
    %v672 = vunpack.c.l.b16 %v640
    %v673 = vunpack.c.l.b16 %v641
    %v674 = vunpack.c.l.b16 %v642
    %v675 = vunpack.c.l.b16 %v643
    %v676 = vunpack.c.l.b16 %v644
    %v677 = vunpack.c.l.b16 %v645
    %v678 = vunpack.c.l.b16 %v646
    %v679 = vunpack.c.l.b16 %v647
    %v680 = vunpack.c.l.b16 %v648
    %v681 = vunpack.c.l.b16 %v649
    %v682 = vunpack.c.l.b16 %v650
    %v683 = vpack.c.b16 %v668, %v667
    %v684 = vpack.c.b16 %v670, %v669
    %v685 = vpack.c.b16 %v672, %v671
    %v686 = vpack.c.b16 %v674, %v673
    %v687 = vpack.c.b16 %v676, %v675
    %v688 = vpack.c.b16 %v678, %v677
    %v689 = vpack.c.b16 %v680, %v679
    %v690 = vpack.c.b16 %v682, %v681
    %699 = vmatpush.bf16.msra.mxu0 %v690
    %700 = vmatpush.bf16.msra.mxu0 %v689
    %701 = vmatpush.bf16.msra.mxu0 %v688
    %702 = vmatpush.bf16.msra.mxu0 %v687
    %703 = vmatpush.bf16.msra.mxu0 %v686
    %704 = vmatpush.bf16.msra.mxu0 %v685
    %705 = vmatpush.bf16.msra.mxu0 %v684
    %706 = vmatpush.bf16.msra.mxu0 %v683
    %707 = vmatmul.bf16.gmra.mxu0 %v630
    %v708 = vpop.f32.mrf.mxu0
    %v709 = vadd.f32 0.0, %v708
    %v710 = vpop.f32.mrf.mxu0
    %v711 = vadd.f32 0.0, %v710
    %712 = vmatmul.bf16.gmra.mxu0 %v631
    %v713 = vpop.f32.mrf.mxu0
    %v714 = vadd.f32 0.0, %v713
    %v715 = vpop.f32.mrf.mxu0
    %v716 = vadd.f32 0.0, %v715
    %717 = vmatmul.bf16.gmra.mxu0 %v632
    %v718 = vpop.f32.mrf.mxu0
    %v719 = vadd.f32 0.0, %v718
    %v720 = vpop.f32.mrf.mxu0
    %v721 = vadd.f32 0.0, %v720
    %722 = vmatmul.bf16.gmra.mxu0 %v633
    %v723 = vpop.f32.mrf.mxu0
    %v724 = vadd.f32 0.0, %v723
    %v725 = vpop.f32.mrf.mxu0
    %v726 = vadd.f32 0.0, %v725
    %727 = vdwg.mxu0
    %v728 = vmul.f32 %v611, 0.71231794
    %v729 = vmul.f32 %v613, 0.71231794
    %v730 = vmul.f32 %v616, 0.71231794
    %v731 = vmul.f32 %v618, 0.71231794
    %v732 = vmul.f32 %v621, 0.71231794
    %v733 = vmul.f32 %v623, 0.71231794
    %v734 = vmul.f32 %v626, 0.71231794
    %v735 = vmul.f32 %v628, 0.71231794
    %v736 = vadd.f32 %v728, %v709
    %v737 = vadd.f32 %v729, %v711
    %v738 = vadd.f32 %v730, %v714
    %v739 = vadd.f32 %v731, %v716
    %v740 = vadd.f32 %v732, %v719
    %v741 = vadd.f32 %v733, %v721
    %v742 = vadd.f32 %v734, %v724
    %v743 = vadd.f32 %v735, %v726
    %v744 = vadd.f32 %v736, %v589
    %v745 = vadd.f32 %v737, %v590
    %v746 = vadd.f32 %v738, %v591
    %v747 = vadd.f32 %v739, %v592
    %v748 = vadd.f32 %v740, %v593
    %v749 = vadd.f32 %v741, %v594
    %v750 = vadd.f32 %v742, %v595
    %v751 = vadd.f32 %v743, %v596
    %v752 = vmax.f32 %v744, 0.0
    %v753 = vmax.f32 %v745, 0.0
    %v754 = vmax.f32 %v746, 0.0
    %v755 = vmax.f32 %v747, 0.0
    %v756 = vmax.f32 %v748, 0.0
    %v757 = vmax.f32 %v749, 0.0
    %v758 = vmax.f32 %v750, 0.0
    %v759 = vmax.f32 %v751, 0.0
    %v760 = vpack.c.bf16 %v753, %v752
    %v761 = vpack.c.bf16 %v755, %v754
    %v762 = vpack.c.bf16 %v757, %v756
    %v763 = vpack.c.bf16 %v759, %v758
    %764 = vmatpush.bf16.msra.mxu0 0
    %765 = vmatpush.bf16.msra.mxu0 0
    %766 = vmatpush.bf16.msra.mxu0 0
    %767 = vmatpush.bf16.msra.mxu0 0
    %768 = vmatpush.bf16.msra.mxu0 %v763
    %769 = vmatpush.bf16.msra.mxu0 %v762
    %770 = vmatpush.bf16.msra.mxu0 %v761
    %771 = vmatpush.bf16.msra.mxu0 %v760
    %772 = vmatmul.bf16.gmra.mxu0 %v265
    %v773 = vpop.f32.mrf.mxu0
    %v774 = vadd.f32 %v223, %v773
    %v775 = vpop.f32.mrf.mxu0
    %v776 = vadd.f32 %v224, %v775
    %777 = vmatmul.bf16.gmra.mxu0 %v268
    %v778 = vpop.f32.mrf.mxu0
    %v779 = vadd.f32 %v225, %v778
    %v780 = vpop.f32.mrf.mxu0
    %v781 = vadd.f32 %v226, %v780
    %782 = vmatmul.bf16.gmra.mxu0 %v271
    %v783 = vpop.f32.mrf.mxu0
    %v784 = vadd.f32 %v227, %v783
    %v785 = vpop.f32.mrf.mxu0
    %v786 = vadd.f32 %v228, %v785
    %787 = vmatmul.bf16.gmra.mxu0 %v274
    %v788 = vpop.f32.mrf.mxu0
    %v789 = vadd.f32 %v229, %v788
    %v790 = vpop.f32.mrf.mxu0
    %v791 = vadd.f32 %v230, %v790
    %792 = vdwg.mxu0
    %v793 = vpack.c.bf16 %v776, %v774
    %v794 = vpack.c.bf16 %v781, %v779
    %v795 = vpack.c.bf16 %v786, %v784
    %v796 = vpack.c.bf16 %v791, %v789
    %s797 = scalar_lea.vmem [#allocation8], 192
    %v798 = vld [vmem:[%s797] sm:$0xf]
    %v799 = vld [vmem:[%s797 + $0x4] sm:$0xf]
    %v800 = vld [vmem:[%s797 + $0x8] sm:$0xf]
    %v801 = vld [vmem:[%s797 + $0xc] sm:$0xf]
    %v802 = vld [vmem:[%s797 + $0x10] sm:$0xf]
    %v803 = vld [vmem:[%s797 + $0x14] sm:$0xf]
    %v804 = vld [vmem:[%s797 + $0x18] sm:$0xf]
    %v805 = vld [vmem:[%s797 + $0x1c] sm:$0xf]
    %v806 = vld [vmem:[%s797 + $0x20] sm:$0xf]
    %v807 = vld [vmem:[%s797 + $0x24] sm:$0xf]
    %v808 = vld [vmem:[%s797 + $0x28] sm:$0xf]
    %v809 = vld [vmem:[%s797 + $0x2c] sm:$0xf]
    %v810 = vld [vmem:[%s797 + $0x30] sm:$0xf]
    %v811 = vld [vmem:[%s797 + $0x34] sm:$0xf]
    %v812 = vld [vmem:[%s797 + $0x38] sm:$0xf]
    %v813 = vld [vmem:[%s797 + $0x3c] sm:$0xf]
    %v830 = vunpack.c.l.b16 %v798
    %v831 = vunpack.c.l.b16 %v799
    %v832 = vunpack.c.l.b16 %v800
    %v833 = vunpack.c.l.b16 %v801
    %v834 = vunpack.c.l.b16 %v802
    %v835 = vunpack.c.l.b16 %v803
    %v836 = vunpack.c.l.b16 %v804
    %v837 = vunpack.c.l.b16 %v805
    %v838 = vunpack.c.l.b16 %v806
    %v839 = vunpack.c.l.b16 %v807
    %v840 = vunpack.c.l.b16 %v808
    %v841 = vunpack.c.l.b16 %v809
    %v842 = vunpack.c.l.b16 %v810
    %v843 = vunpack.c.l.b16 %v811
    %v844 = vunpack.c.l.b16 %v812
    %v845 = vunpack.c.l.b16 %v813
    %v846 = vpack.c.b16 %v831, %v830
    %v847 = vpack.c.b16 %v833, %v832
    %v848 = vpack.c.b16 %v835, %v834
    %v849 = vpack.c.b16 %v837, %v836
    %v850 = vpack.c.b16 %v839, %v838
    %v851 = vpack.c.b16 %v841, %v840
    %v852 = vpack.c.b16 %v843, %v842
    %v853 = vpack.c.b16 %v845, %v844
    %862 = vmatpush.bf16.msra.mxu0 %v853
    %863 = vmatpush.bf16.msra.mxu0 %v852
    %864 = vmatpush.bf16.msra.mxu0 %v851
    %865 = vmatpush.bf16.msra.mxu0 %v850
    %866 = vmatpush.bf16.msra.mxu0 %v849
    %867 = vmatpush.bf16.msra.mxu0 %v848
    %868 = vmatpush.bf16.msra.mxu0 %v847
    %869 = vmatpush.bf16.msra.mxu0 %v846
    %870 = vmatmul.bf16.gmra.mxu0 %v793
    %v871 = vpop.f32.mrf.mxu0
    %v872 = vadd.f32 0.0, %v871
    %v873 = vpop.f32.mrf.mxu0
    %v874 = vadd.f32 0.0, %v873
    %875 = vmatmul.bf16.gmra.mxu0 %v794
    %v876 = vpop.f32.mrf.mxu0
    %v877 = vadd.f32 0.0, %v876
    %v878 = vpop.f32.mrf.mxu0
    %v879 = vadd.f32 0.0, %v878
    %880 = vmatmul.bf16.gmra.mxu0 %v795
    %v881 = vpop.f32.mrf.mxu0
    %v882 = vadd.f32 0.0, %v881
    %v883 = vpop.f32.mrf.mxu0
    %v884 = vadd.f32 0.0, %v883
    %885 = vmatmul.bf16.gmra.mxu0 %v796
    %v886 = vpop.f32.mrf.mxu0
    %v887 = vadd.f32 0.0, %v886
    %v888 = vpop.f32.mrf.mxu0
    %v889 = vadd.f32 0.0, %v888
    %890 = vdwg.mxu0
    %v891 = vmul.f32 %v774, 0.7768564
    %v892 = vmul.f32 %v776, 0.7768564
    %v893 = vmul.f32 %v779, 0.7768564
    %v894 = vmul.f32 %v781, 0.7768564
    %v895 = vmul.f32 %v784, 0.7768564
    %v896 = vmul.f32 %v786, 0.7768564
    %v897 = vmul.f32 %v789, 0.7768564
    %v898 = vmul.f32 %v791, 0.7768564
    %v899 = vadd.f32 %v891, %v872
    %v900 = vadd.f32 %v892, %v874
    %v901 = vadd.f32 %v893, %v877
    %v902 = vadd.f32 %v894, %v879
    %v903 = vadd.f32 %v895, %v882
    %v904 = vadd.f32 %v896, %v884
    %v905 = vadd.f32 %v897, %v887
    %v906 = vadd.f32 %v898, %v889
    %v907 = vadd.f32 %v899, %v752
    %v908 = vadd.f32 %v900, %v753
    %v909 = vadd.f32 %v901, %v754
    %v910 = vadd.f32 %v902, %v755
    %v911 = vadd.f32 %v903, %v756
    %v912 = vadd.f32 %v904, %v757
    %v913 = vadd.f32 %v905, %v758
    %v914 = vadd.f32 %v906, %v759
    %v915 = vmax.f32 %v907, 0.0
    %v916 = vmax.f32 %v908, 0.0
    %v917 = vmax.f32 %v909, 0.0
    %v918 = vmax.f32 %v910, 0.0
    %v919 = vmax.f32 %v911, 0.0
    %v920 = vmax.f32 %v912, 0.0
    %v921 = vmax.f32 %v913, 0.0
    %v922 = vmax.f32 %v914, 0.0
    %v923 = vpack.c.bf16 %v916, %v915
    %v924 = vpack.c.bf16 %v918, %v917
    %v925 = vpack.c.bf16 %v920, %v919
    %v926 = vpack.c.bf16 %v922, %v921
    %v927 = vld [vmem:[#allocation10] sm:$0xf]
    %v928 = vld [vmem:[#allocation10 + $0x4] sm:$0xf]
    %v929 = vld [vmem:[#allocation10 + $0x8] sm:$0xf]
    %v930 = vld [vmem:[#allocation10 + $0xc] sm:$0xf]
    %v931 = vld [vmem:[#allocation10 + $0x10] sm:$0xf]
    %v932 = vld [vmem:[#allocation10 + $0x14] sm:$0xf]
    %v933 = vld [vmem:[#allocation10 + $0x18] sm:$0xf]
    %v934 = vld [vmem:[#allocation10 + $0x1c] sm:$0xf]
    %v935 = vld [vmem:[#allocation10 + $0x20] sm:$0xf]
    %v936 = vld [vmem:[#allocation10 + $0x24] sm:$0xf]
    %v937 = vld [vmem:[#allocation10 + $0x28] sm:$0xf]
    %v938 = vld [vmem:[#allocation10 + $0x2c] sm:$0xf]
    %v939 = vld [vmem:[#allocation10 + $0x30] sm:$0xf]
    %v940 = vld [vmem:[#allocation10 + $0x34] sm:$0xf]
    %v941 = vld [vmem:[#allocation10 + $0x38] sm:$0xf]
    %v942 = vld [vmem:[#allocation10 + $0x3c] sm:$0xf]
    %v943 = vld [vmem:[%s6] sm:$0x1]
    %v945 = vperm.slane %v943, 0
    %v963 = vunpack.c.l.b16 %v927
    %v964 = vunpack.c.l.b16 %v928
    %v965 = vunpack.c.l.b16 %v929
    %v966 = vunpack.c.l.b16 %v930
    %v967 = vunpack.c.l.b16 %v931
    %v968 = vunpack.c.l.b16 %v932
    %v969 = vunpack.c.l.b16 %v933
    %v970 = vunpack.c.l.b16 %v934
    %v971 = vunpack.c.l.b16 %v935
    %v972 = vunpack.c.l.b16 %v936
    %v973 = vunpack.c.l.b16 %v937
    %v974 = vunpack.c.l.b16 %v938
    %v975 = vunpack.c.l.b16 %v939
    %v976 = vunpack.c.l.b16 %v940
    %v977 = vunpack.c.l.b16 %v941
    %v978 = vunpack.c.l.b16 %v942
    %v979 = vpack.c.b16 %v964, %v963
    %v980 = vpack.c.b16 %v966, %v965
    %v981 = vpack.c.b16 %v968, %v967
    %v982 = vpack.c.b16 %v970, %v969
    %v983 = vpack.c.b16 %v972, %v971
    %v984 = vpack.c.b16 %v974, %v973
    %v985 = vpack.c.b16 %v976, %v975
    %v986 = vpack.c.b16 %v978, %v977
    %995 = vmatpush.bf16.msra.mxu0 %v986
    %996 = vmatpush.bf16.msra.mxu0 %v985
    %997 = vmatpush.bf16.msra.mxu0 %v984
    %998 = vmatpush.bf16.msra.mxu0 %v983
    %999 = vmatpush.bf16.msra.mxu0 %v982
    %1000 = vmatpush.bf16.msra.mxu0 %v981
    %1001 = vmatpush.bf16.msra.mxu0 %v980
    %1002 = vmatpush.bf16.msra.mxu0 %v979
    %1003 = vmatmul.bf16.gmra.mxu0 %v923
    %v1004 = vpop.f32.mrf.mxu0
    %v1005 = vadd.f32 %v945, %v1004
    %v1006 = vpop.f32.mrf.mxu0
    %v1007 = vadd.f32 %v945, %v1006
    %1008 = vmatmul.bf16.gmra.mxu0 %v924
    %v1009 = vpop.f32.mrf.mxu0
    %v1010 = vadd.f32 %v945, %v1009
    %v1011 = vpop.f32.mrf.mxu0
    %v1012 = vadd.f32 %v945, %v1011
    %1013 = vmatmul.bf16.gmra.mxu0 %v925
    %v1014 = vpop.f32.mrf.mxu0
    %v1015 = vadd.f32 %v945, %v1014
    %v1016 = vpop.f32.mrf.mxu0
    %v1017 = vadd.f32 %v945, %v1016
    %1018 = vmatmul.bf16.gmra.mxu0 %v926
    %v1019 = vpop.f32.mrf.mxu0
    %v1020 = vadd.f32 %v945, %v1019
    %v1021 = vpop.f32.mrf.mxu0
    %v1022 = vadd.f32 %v945, %v1021
    %1023 = vdwg.mxu0
    %1024 = vst [vmem:[#allocation11] sm:$0xff] %v1005
    %1025 = vst [vmem:[#allocation11 + $0x8] sm:$0xff] %v1007
    %1026 = vst [vmem:[#allocation11 + $0x10] sm:$0xff] %v1010
    %1027 = vst [vmem:[#allocation11 + $0x18] sm:$0xff] %v1012
    %1028 = vst [vmem:[#allocation11 + $0x20] sm:$0xff] %v1015
    %1029 = vst [vmem:[#allocation11 + $0x28] sm:$0xff] %v1017
    %1030 = vst [vmem:[#allocation11 + $0x30] sm:$0xff] %v1020
    %1031 = vst [vmem:[#allocation11 + $0x38] sm:$0xff] %v1022
    // Predicated region
    $region50: #{tpu_custom_call.1} parent=1 // pred_check
      _
    $region51: #{tpu_custom_call.1} parent=1 // pred_check_branch
      %1033 = sbr.rel (0) target = $region53
    $region52: #{tpu_custom_call.1} parent=1 // pred_region
      %1035 = vsyncadd [#allocation4], 0
      %s1036 = sshll.u32 [#allocation11], 4
      %s1037 = int_to_ptr.vmem [resolvable:$true] %s1036
      %s1038 = sshll.u32 %s7, 4
      %s1039 = int_to_ptr.hbm [resolvable:$true] %s1038
      %1044 = dma.vmem_to_hbm [thread:$0]  %s1037, 1024, %s1039, [#allocation4], 128, 128, 8
    $region53: #{tpu_custom_call.1} parent=1 // pred_fallthru
      _
    // Predicated region
    $region54: #{tpu_custom_call.1} parent=1 // pred_check
      _
    $region55: #{tpu_custom_call.1} parent=1 // pred_check_branch
      %1046 = sbr.rel (0) target = $region57
    $region56: #{tpu_custom_call.1} parent=1 // pred_region
      %1048 = dma.done [#allocation4], 1024
    $region57: #{tpu_custom_call.1} parent=1 // pred_fallthru
      _
    %1049 = vsyncpa [#allocation3], 1
    %1050 = vsyncpa [#allocation6], 1
    %1051 = vsyncpa [#allocation9], 1
    %1052 = vsyncpa [#allocation4], 1

</llo_original>
